<compile_context>
chip_gen: v6e
topology: v6e:2x2x1
jax: 0.10.0
libtpu: 0.0.40
codegen_flags: <defaults>
</compile_context>

<pallas_src>
import functools

import jax
import jax.numpy as jnp
from jax.experimental import pallas as pl
from jax.experimental.pallas import tpu as pltpu


def _roll_lanes(v, shift):
    """Rotate a (B, C, L) f32 array along its lane (last) axis; shift >= 0."""
    b, c, l = v.shape
    return pltpu.roll(v.reshape(b * c, l), shift=shift, axis=1).reshape(b, c, l)


def _f_conv_drop_kernel(x_ref, mask_ref, w1_ref, b1_ref, w2_ref, b2_ref, o_ref, *,
                        C_in):
    # x_ref   : (B, 2*C_in, Lp)  rows [0:C_in] = even positions, [C_in:] = odd
    # mask_ref: (2, Lp) float    row 0 = not-first-position, row 1 = not-last
    # w1_ref  : (C_out, C_in)    b1_ref: (C_out, 1)
    # w2_ref  : (C_out, 3)       b2_ref: (C_out, 1)   (pre-scaled by 0.5 pool factor)
    # o_ref   : (B, C_out, Lp)   final output layout -> no wrapper-side unfold
    C_out = o_ref.shape[1]
    Lp = o_ref.shape[2]

    x_e = x_ref[:, 0:C_in, :]                 # (B, C_in, Lp) positions 2p
    x_o = x_ref[:, C_in:2 * C_in, :]          # (B, C_in, Lp) positions 2p+1

    # Hoisted parameter splats (reused by both planes; JAX does not CSE these).
    w1 = w1_ref[...]                          # (C_out, C_in)
    b1 = b1_ref[...][None]                    # (1, C_out, 1)
    w2 = w2_ref[...]                          # (C_out, 3), pre-scaled by 0.5
    b2 = b2_ref[...][None]                    # (1, C_out, 1), pre-scaled by 0.5
    w1_cols = [w1[:, i:i + 1][None] for i in range(C_in)]   # each (1, C_out, 1)
    w2_0 = w2[:, 0:1][None]
    w2_1 = w2[:, 1:2][None]
    w2_2 = w2[:, 2:3][None]

    not_first = mask_ref[0:1, :][None]        # (1, 1, Lp), zero at p == 0
    not_last = mask_ref[1:2, :][None]         # (1, 1, Lp), zero at p == Lp-1

    # ---- pointwise Conv1d(k=1) + ReLU -------------------------------------
    def pointwise_relu(xq):                   # xq: (B, C_in, Lp)
        if C_in <= 8:
            # Tiny contraction: C_in VPU FMAs (broadcast over batch & lanes).
            acc = w1_cols[0] * xq[:, 0:1, :]
            for i in range(1, C_in):
                acc = acc + w1_cols[i] * xq[:, i:i + 1, :]
        else:
            # Larger channel counts: batched MXU matmul (vector-extended slot idle).
            acc = jnp.einsum(
                'boi,bil->bol',
                jnp.broadcast_to(w1[None], (xq.shape[0], C_out, C_in)),
                xq, preferred_element_type=jnp.float32)
        return jnp.maximum(acc + b1, 0.0)

    y1_e = pointwise_relu(x_e)                # y1 at positions 2p
    y1_o = pointwise_relu(x_o)                # y1 at positions 2p+1

    # ---- depthwise Conv1d(k=3, pad=1, groups=C_out) + ReLU -----------------
    #   y2[2p]   = w0*y1[2p-1] + w1*y1[2p]   + w2*y1[2p+1]
    #   y2[2p+1] = w0*y1[2p]   + w1*y1[2p+1] + w2*y1[2p+2]
    prev_e = _roll_lanes(y1_o, 1) * not_first        # y1[2p-1], zero pad at p == 0
    next_o = _roll_lanes(y1_e, Lp - 1) * not_last    # y1[2p+2], zero pad at p == Lp-1

    y2_e = jnp.maximum(w2_0 * prev_e + w2_1 * y1_e + w2_2 * y1_o + b2, 0.0)
    y2_o = jnp.maximum(w2_0 * y1_e + w2_1 * y1_o + w2_2 * next_o + b2, 0.0)

    # ---- Dropout(0.5): identity (eval mode) --------------------------------
    # TODO(synk): train-mode dropout (Bernoulli mask + 2x scale via pltpu.prng_*)
    #             is not reproduced; inference semantics only.
    # ---- AvgPool1d(k=2): 0.5 already folded into w2/b2 ---------------------
    o_ref[...] = (y2_e + y2_o).astype(o_ref.dtype)


def _hw_vmem_bytes():
    """Physical VMEM of the local generation; conservative fallback = 64 MiB (v7x)."""
    try:
        info = pltpu.get_tpu_info()
        cap = getattr(info, "vmem_capacity_bytes", None)
        if cap:
            return int(cap)
    except Exception:
        pass
    return 64 * 1024 * 1024


def _choose_b_tile(N, bytes_per_batch, budget_bytes):
    """Largest divisor of N whose pipelined block footprint fits the VMEM budget,
    preferring any choice that still leaves >= 2 grid steps (v7x megacore)."""
    best = 1
    best_multi = None
    for d in range(1, N + 1):
        if N % d:
            continue
        if d * bytes_per_batch <= budget_bytes:
            best = d
            if N // d >= 2:
                best_multi = d
    return best_multi if best_multi is not None else best


def f_conv_drop(x, w1, b1, w2, b2):
    """x: (N, C_in, L) -> (N, C_out, L // 2).

    Conv1d(k=1)+ReLU -> depthwise Conv1d(k=3, pad=1)+ReLU -> Dropout(eval) ->
    AvgPool1d(2).  w2 is the depthwise weight (C_out, 1, 3) squeezed to (C_out, 3).
    """
    N, C_in, L = x.shape
    C_out = w1.shape[0]
    Lp = L // 2                  # pooled output length
    Lp_k = (L + 1) // 2          # per-batch plane length used by the kernel
    if 2 * Lp_k != L:            # odd L: pad one zero; extra pooled slot sliced off below
        x = jnp.pad(x, ((0, 0), (0, 0), (0, 2 * Lp_k - L)))

    # De-interleave even/odd positions into the sublane axis (single HBM pass):
    #   planes[n, q*C_in + c, p] = x[n, c, 2p + q]
    planes = (x.reshape(N, C_in, Lp_k, 2)
                .transpose(0, 3, 1, 2)
                .reshape(N, 2 * C_in, Lp_k)
                .astype(jnp.float32))

    w1c = w1.reshape(C_out, C_in).astype(jnp.float32)
    b1c = b1.reshape(C_out, 1).astype(jnp.float32)
    # Fold the AvgPool 1/2 into the depthwise conv (ReLU is positively homogeneous).
    w2c = (0.5 * w2.reshape(C_out, 3)).astype(jnp.float32)
    b2c = (0.5 * b2.reshape(C_out, 1)).astype(jnp.float32)

    # Grid-invariant boundary masks (constant block index -> DMA'd once).
    not_first = jnp.ones((Lp_k,), jnp.float32).at[0].set(0.0)
    not_last = jnp.ones((Lp_k,), jnp.float32).at[Lp_k - 1].set(0.0)
    masks = jnp.stack([not_first, not_last])                 # (2, Lp_k)

    # ---- generation-aware tiling -------------------------------------------
    hw_vmem = _hw_vmem_bytes()
    lane_pad = 128 * ((Lp_k + 127) // 128)                   # VMEM lane padding
    rows_in = 8 * ((2 * C_in + 7) // 8)
    rows_out = 8 * ((C_out + 7) // 8)
    # 2x double-buffered in/out blocks + ~10 live f32 temporaries per batch elt.
    bytes_per_batch = (2 * 2 * rows_in + 2 * 2 * rows_out + 10 * rows_out) * lane_pad * 4
    budget = hw_vmem // 3                                    # ~21 MiB v7x, ~42 MiB v5e/v6e
    B_tile = _choose_b_tile(N, bytes_per_batch, budget)
    grid = (N // B_tile,)

    kernel = functools.partial(_f_conv_drop_kernel, C_in=C_in)

    out = pl.pallas_call(
        kernel,
        out_shape=jax.ShapeDtypeStruct((N, C_out, Lp_k), jnp.float32),
        grid_spec=pltpu.PrefetchScalarGridSpec(
            num_scalar_prefetch=0,
            grid=grid,
            in_specs=[
                pl.BlockSpec((B_tile, 2 * C_in, Lp_k), lambda g: (g, 0, 0)),
                pl.BlockSpec((2, Lp_k), lambda g: (0, 0)),
                pl.BlockSpec((C_out, C_in), lambda g: (0, 0)),
                pl.BlockSpec((C_out, 1), lambda g: (0, 0)),
                pl.BlockSpec((C_out, 3), lambda g: (0, 0)),
                pl.BlockSpec((C_out, 1), lambda g: (0, 0)),
            ],
            out_specs=pl.BlockSpec((B_tile, C_out, Lp_k), lambda g: (g, 0, 0)),
        ),
        compiler_params=pltpu.CompilerParams(
            dimension_semantics=("parallel",),
            # ~48 MiB on v7x (64 MiB physical), ~96 MiB on v5e/v6e (128 MiB physical).
            vmem_limit_bytes=min(int(hw_vmem * 3 // 4), 96 * 1024 * 1024),
        ),
    )(planes, masks, w1c, b1c, w2c, b2c)

    if Lp_k != Lp:               # odd L: drop the pooled slot fed by the padded tail
        out = out[:, :, :Lp]
    return out


def _reference(x, w1, b1, w2, b2):
    # pointwise conv + relu
    y1 = jnp.einsum("oi,nil->nol", w1, x) + b1[None, :, None]
    y1 = jnp.maximum(y1, 0.0)
    # depthwise conv k=3 pad=1 + relu
    y1p = jnp.pad(y1, ((0, 0), (0, 0), (1, 1)))
    y2 = (w2[None, :, 0:1] * y1p[:, :, 0:-2]
          + w2[None, :, 1:2] * y1p[:, :, 1:-1]
          + w2[None, :, 2:3] * y1p[:, :, 2:]) + b2[None, :, None]
    y2 = jnp.maximum(y2, 0.0)
    # dropout (eval) = identity; avg pool k=2 (drops trailing element if L odd)
    N, C, L = y2.shape
    Lp = L // 2
    return y2[:, :, :2 * Lp].reshape(N, C, Lp, 2).mean(axis=-1)


if __name__ == "__main__":
    key = jax.random.PRNGKey(0)
    k_x, k_w1, k_b1, k_w2, k_b2, k_x2 = jax.random.split(key, 6)

    N, C_in, C_out, L = 2, 4, 8, 16
    x = jax.random.normal(k_x, (N, C_in, L), dtype=jnp.float32)

    # Deterministic parameter init (Conv1d-like uniform fan-in scaling).
    w1 = jax.random.uniform(k_w1, (C_out, C_in), jnp.float32, -0.5, 0.5)
    b1 = jax.random.uniform(k_b1, (C_out,), jnp.float32, -0.5, 0.5)
    w2 = jax.random.uniform(k_w2, (C_out, 3), jnp.float32, -0.5, 0.5)  # (C_out,1,3) squeezed
    b2 = jax.random.uniform(k_b2, (C_out,), jnp.float32, -0.5, 0.5)

    out = jax.block_until_ready(f_conv_drop(x, w1, b1, w2, b2))
    ref = _reference(x, w1, b1, w2, b2)
    assert out.shape == (N, C_out, L // 2), out.shape
    assert jnp.allclose(out, ref, atol=1e-5, rtol=1e-5), float(jnp.max(jnp.abs(out - ref)))

    # Odd length: AvgPool1d drops the trailing conv output (padding path).
    L_odd = 15
    x2 = jax.random.normal(k_x2, (N, C_in, L_odd), dtype=jnp.float32)
    out2 = jax.block_until_ready(f_conv_drop(x2, w1, b1, w2, b2))
    ref2 = _reference(x2, w1, b1, w2, b2)
    assert out2.shape == (N, C_out, L_odd // 2), out2.shape
    assert jnp.allclose(out2, ref2, atol=1e-5, rtol=1e-5), float(jnp.max(jnp.abs(out2 - ref2)))

    print("KERNEL_OK")
</pallas_src>

<mosaic_0001>
module attributes {stable_mosaic.version = 11 : i64} {
  func.func @_f_conv_drop_kernel(%arg0: i32, %arg1: memref<1x8x8xf32, #tpu.memory_space<vmem>>, %arg2: memref<2x8xf32, #tpu.memory_space<vmem>>, %arg3: memref<8x4xf32, #tpu.memory_space<vmem>>, %arg4: memref<8x1xf32, #tpu.memory_space<vmem>>, %arg5: memref<8x3xf32, #tpu.memory_space<vmem>>, %arg6: memref<8x1xf32, #tpu.memory_space<vmem>>, %arg7: memref<1x8x8xf32, #tpu.memory_space<vmem>>) attributes {dimension_semantics = [#tpu.dimension_semantics<parallel>], iteration_bounds = array<i64: 2>, scalar_prefetch = 0 : i64, scratch_operands = 0 : i64, tpu.core_type = #tpu.core_type<tc>, window_params = [{transform_indices = @transform_0, window_bounds = array<i64: 1, 8, 8>}, {pipeline_mode = #tpu.pipeline_mode<synchronous>, transform_indices = @transform_1, window_bounds = array<i64: 2, 8>}, {pipeline_mode = #tpu.pipeline_mode<synchronous>, transform_indices = @transform_2, window_bounds = array<i64: 8, 4>}, {pipeline_mode = #tpu.pipeline_mode<synchronous>, transform_indices = @transform_3, window_bounds = array<i64: 8, 1>}, {pipeline_mode = #tpu.pipeline_mode<synchronous>, transform_indices = @transform_4, window_bounds = array<i64: 8, 3>}, {pipeline_mode = #tpu.pipeline_mode<synchronous>, transform_indices = @transform_5, window_bounds = array<i64: 8, 1>}, {transform_indices = @transform_6, window_bounds = array<i64: 1, 8, 8>}]} {
    %c0 = arith.constant 0 : index
    %c0_0 = arith.constant 0 : index
    %c0_1 = arith.constant 0 : index
    %0 = vector.load %arg1[%c0, %c0_0, %c0_1] : memref<1x8x8xf32, #tpu.memory_space<vmem>>, vector<1x4x8xf32>
    %c0_2 = arith.constant 0 : index
    %c4 = arith.constant 4 : index
    %c0_3 = arith.constant 0 : index
    %1 = vector.load %arg1[%c0_2, %c4, %c0_3] : memref<1x8x8xf32, #tpu.memory_space<vmem>>, vector<1x4x8xf32>
    %c0_4 = arith.constant 0 : index
    %c0_5 = arith.constant 0 : index
    %2 = vector.load %arg3[%c0_4, %c0_5] : memref<8x4xf32, #tpu.memory_space<vmem>>, vector<8x4xf32>
    %c0_6 = arith.constant 0 : index
    %c0_7 = arith.constant 0 : index
    %3 = vector.load %arg4[%c0_6, %c0_7] : memref<8x1xf32, #tpu.memory_space<vmem>>, vector<8x1xf32>
    %4 = vector.shape_cast %3 : vector<8x1xf32> to vector<1x8x1xf32>
    %c0_8 = arith.constant 0 : index
    %c0_9 = arith.constant 0 : index
    %5 = vector.load %arg5[%c0_8, %c0_9] : memref<8x3xf32, #tpu.memory_space<vmem>>, vector<8x3xf32>
    %c0_10 = arith.constant 0 : index
    %c0_11 = arith.constant 0 : index
    %6 = vector.load %arg6[%c0_10, %c0_11] : memref<8x1xf32, #tpu.memory_space<vmem>>, vector<8x1xf32>
    %7 = vector.shape_cast %6 : vector<8x1xf32> to vector<1x8x1xf32>
    %8 = vector.extract_strided_slice %2 {offsets = [0, 0], sizes = [8, 1], strides = [1, 1]} : vector<8x4xf32> to vector<8x1xf32>
    %9 = vector.shape_cast %8 : vector<8x1xf32> to vector<1x8x1xf32>
    %10 = vector.extract_strided_slice %2 {offsets = [0, 1], sizes = [8, 1], strides = [1, 1]} : vector<8x4xf32> to vector<8x1xf32>
    %11 = vector.shape_cast %10 : vector<8x1xf32> to vector<1x8x1xf32>
    %12 = vector.extract_strided_slice %2 {offsets = [0, 2], sizes = [8, 1], strides = [1, 1]} : vector<8x4xf32> to vector<8x1xf32>
    %13 = vector.shape_cast %12 : vector<8x1xf32> to vector<1x8x1xf32>
    %14 = vector.extract_strided_slice %2 {offsets = [0, 3], sizes = [8, 1], strides = [1, 1]} : vector<8x4xf32> to vector<8x1xf32>
    %15 = vector.shape_cast %14 : vector<8x1xf32> to vector<1x8x1xf32>
    %16 = vector.extract_strided_slice %5 {offsets = [0, 0], sizes = [8, 1], strides = [1, 1]} : vector<8x3xf32> to vector<8x1xf32>
    %17 = vector.shape_cast %16 : vector<8x1xf32> to vector<1x8x1xf32>
    %18 = vector.extract_strided_slice %5 {offsets = [0, 1], sizes = [8, 1], strides = [1, 1]} : vector<8x3xf32> to vector<8x1xf32>
    %19 = vector.shape_cast %18 : vector<8x1xf32> to vector<1x8x1xf32>
    %20 = vector.extract_strided_slice %5 {offsets = [0, 2], sizes = [8, 1], strides = [1, 1]} : vector<8x3xf32> to vector<8x1xf32>
    %21 = vector.shape_cast %20 : vector<8x1xf32> to vector<1x8x1xf32>
    %c0_12 = arith.constant 0 : index
    %c0_13 = arith.constant 0 : index
    %22 = vector.load %arg2[%c0_12, %c0_13] : memref<2x8xf32, #tpu.memory_space<vmem>>, vector<1x8xf32>
    %23 = vector.shape_cast %22 : vector<1x8xf32> to vector<1x1x8xf32>
    %c1 = arith.constant 1 : index
    %c0_14 = arith.constant 0 : index
    %24 = vector.load %arg2[%c1, %c0_14] : memref<2x8xf32, #tpu.memory_space<vmem>>, vector<1x8xf32>
    %25 = vector.shape_cast %24 : vector<1x8xf32> to vector<1x1x8xf32>
    %26 = vector.extract_strided_slice %0 {offsets = [0, 0, 0], sizes = [1, 1, 8], strides = [1, 1, 1]} : vector<1x4x8xf32> to vector<1x1x8xf32>
    %27 = vector.broadcast %9 : vector<1x8x1xf32> to vector<1x8x8xf32>
    %28 = vector.broadcast %26 : vector<1x1x8xf32> to vector<1x8x8xf32>
    %29 = arith.mulf %27, %28 : vector<1x8x8xf32>
    %30 = vector.extract_strided_slice %0 {offsets = [0, 1, 0], sizes = [1, 1, 8], strides = [1, 1, 1]} : vector<1x4x8xf32> to vector<1x1x8xf32>
    %31 = vector.broadcast %11 : vector<1x8x1xf32> to vector<1x8x8xf32>
    %32 = vector.broadcast %30 : vector<1x1x8xf32> to vector<1x8x8xf32>
    %33 = arith.mulf %31, %32 : vector<1x8x8xf32>
    %34 = arith.addf %29, %33 : vector<1x8x8xf32>
    %35 = vector.extract_strided_slice %0 {offsets = [0, 2, 0], sizes = [1, 1, 8], strides = [1, 1, 1]} : vector<1x4x8xf32> to vector<1x1x8xf32>
    %36 = vector.broadcast %13 : vector<1x8x1xf32> to vector<1x8x8xf32>
    %37 = vector.broadcast %35 : vector<1x1x8xf32> to vector<1x8x8xf32>
    %38 = arith.mulf %36, %37 : vector<1x8x8xf32>
    %39 = arith.addf %34, %38 : vector<1x8x8xf32>
    %40 = vector.extract_strided_slice %0 {offsets = [0, 3, 0], sizes = [1, 1, 8], strides = [1, 1, 1]} : vector<1x4x8xf32> to vector<1x1x8xf32>
    %41 = vector.broadcast %15 : vector<1x8x1xf32> to vector<1x8x8xf32>
    %42 = vector.broadcast %40 : vector<1x1x8xf32> to vector<1x8x8xf32>
    %43 = arith.mulf %41, %42 : vector<1x8x8xf32>
    %44 = arith.addf %39, %43 : vector<1x8x8xf32>
    %45 = vector.broadcast %4 : vector<1x8x1xf32> to vector<1x8x8xf32>
    %46 = arith.addf %44, %45 : vector<1x8x8xf32>
    %cst = arith.constant 0.000000e+00 : f32
    %47 = vector.broadcast %cst : f32 to vector<1x8x8xf32>
    %48 = arith.maximumf %46, %47 : vector<1x8x8xf32>
    %49 = vector.extract_strided_slice %1 {offsets = [0, 0, 0], sizes = [1, 1, 8], strides = [1, 1, 1]} : vector<1x4x8xf32> to vector<1x1x8xf32>
    %50 = vector.broadcast %9 : vector<1x8x1xf32> to vector<1x8x8xf32>
    %51 = vector.broadcast %49 : vector<1x1x8xf32> to vector<1x8x8xf32>
    %52 = arith.mulf %50, %51 : vector<1x8x8xf32>
    %53 = vector.extract_strided_slice %1 {offsets = [0, 1, 0], sizes = [1, 1, 8], strides = [1, 1, 1]} : vector<1x4x8xf32> to vector<1x1x8xf32>
    %54 = vector.broadcast %11 : vector<1x8x1xf32> to vector<1x8x8xf32>
    %55 = vector.broadcast %53 : vector<1x1x8xf32> to vector<1x8x8xf32>
    %56 = arith.mulf %54, %55 : vector<1x8x8xf32>
    %57 = arith.addf %52, %56 : vector<1x8x8xf32>
    %58 = vector.extract_strided_slice %1 {offsets = [0, 2, 0], sizes = [1, 1, 8], strides = [1, 1, 1]} : vector<1x4x8xf32> to vector<1x1x8xf32>
    %59 = vector.broadcast %13 : vector<1x8x1xf32> to vector<1x8x8xf32>
    %60 = vector.broadcast %58 : vector<1x1x8xf32> to vector<1x8x8xf32>
    %61 = arith.mulf %59, %60 : vector<1x8x8xf32>
    %62 = arith.addf %57, %61 : vector<1x8x8xf32>
    %63 = vector.extract_strided_slice %1 {offsets = [0, 3, 0], sizes = [1, 1, 8], strides = [1, 1, 1]} : vector<1x4x8xf32> to vector<1x1x8xf32>
    %64 = vector.broadcast %15 : vector<1x8x1xf32> to vector<1x8x8xf32>
    %65 = vector.broadcast %63 : vector<1x1x8xf32> to vector<1x8x8xf32>
    %66 = arith.mulf %64, %65 : vector<1x8x8xf32>
    %67 = arith.addf %62, %66 : vector<1x8x8xf32>
    %68 = vector.broadcast %4 : vector<1x8x1xf32> to vector<1x8x8xf32>
    %69 = arith.addf %67, %68 : vector<1x8x8xf32>
    %cst_15 = arith.constant 0.000000e+00 : f32
    %70 = vector.broadcast %cst_15 : f32 to vector<1x8x8xf32>
    %71 = arith.maximumf %69, %70 : vector<1x8x8xf32>
    %72 = vector.shape_cast %71 : vector<1x8x8xf32> to vector<8x8xf32>
    %c1_i32 = arith.constant 1 : i32
    %73 = tpu.dynamic_rotate %72 by %c1_i32 dim 1 : vector<8x8xf32>, i32 -> vector<8x8xf32>
    %74 = vector.shape_cast %73 : vector<8x8xf32> to vector<1x8x8xf32>
    %75 = vector.broadcast %23 : vector<1x1x8xf32> to vector<1x8x8xf32>
    %76 = arith.mulf %74, %75 : vector<1x8x8xf32>
    %77 = vector.shape_cast %48 : vector<1x8x8xf32> to vector<8x8xf32>
    %c7_i32 = arith.constant 7 : i32
    %78 = tpu.dynamic_rotate %77 by %c7_i32 dim 1 : vector<8x8xf32>, i32 -> vector<8x8xf32>
    %79 = vector.shape_cast %78 : vector<8x8xf32> to vector<1x8x8xf32>
    %80 = vector.broadcast %25 : vector<1x1x8xf32> to vector<1x8x8xf32>
    %81 = arith.mulf %79, %80 : vector<1x8x8xf32>
    %82 = vector.broadcast %17 : vector<1x8x1xf32> to vector<1x8x8xf32>
    %83 = arith.mulf %82, %76 : vector<1x8x8xf32>
    %84 = vector.broadcast %19 : vector<1x8x1xf32> to vector<1x8x8xf32>
    %85 = arith.mulf %84, %48 : vector<1x8x8xf32>
    %86 = arith.addf %83, %85 : vector<1x8x8xf32>
    %87 = vector.broadcast %21 : vector<1x8x1xf32> to vector<1x8x8xf32>
    %88 = arith.mulf %87, %71 : vector<1x8x8xf32>
    %89 = arith.addf %86, %88 : vector<1x8x8xf32>
    %90 = vector.broadcast %7 : vector<1x8x1xf32> to vector<1x8x8xf32>
    %91 = arith.addf %89, %90 : vector<1x8x8xf32>
    %cst_16 = arith.constant 0.000000e+00 : f32
    %92 = vector.broadcast %cst_16 : f32 to vector<1x8x8xf32>
    %93 = arith.maximumf %91, %92 : vector<1x8x8xf32>
    %94 = vector.broadcast %17 : vector<1x8x1xf32> to vector<1x8x8xf32>
    %95 = arith.mulf %94, %48 : vector<1x8x8xf32>
    %96 = vector.broadcast %19 : vector<1x8x1xf32> to vector<1x8x8xf32>
    %97 = arith.mulf %96, %71 : vector<1x8x8xf32>
    %98 = arith.addf %95, %97 : vector<1x8x8xf32>
    %99 = vector.broadcast %21 : vector<1x8x1xf32> to vector<1x8x8xf32>
    %100 = arith.mulf %99, %81 : vector<1x8x8xf32>
    %101 = arith.addf %98, %100 : vector<1x8x8xf32>
    %102 = vector.broadcast %7 : vector<1x8x1xf32> to vector<1x8x8xf32>
    %103 = arith.addf %101, %102 : vector<1x8x8xf32>
    %cst_17 = arith.constant 0.000000e+00 : f32
    %104 = vector.broadcast %cst_17 : f32 to vector<1x8x8xf32>
    %105 = arith.maximumf %103, %104 : vector<1x8x8xf32>
    %106 = arith.addf %93, %105 : vector<1x8x8xf32>
    %c0_18 = arith.constant 0 : index
    %c0_19 = arith.constant 0 : index
    %c0_20 = arith.constant 0 : index
    %107 = vector.load %arg7[%c0_18, %c0_19, %c0_20] : memref<1x8x8xf32, #tpu.memory_space<vmem>>, vector<1x8x8xf32>
    tpu.vector_store %arg7[%c0_18, %c0_19, %c0_20], %106 {strides = array<i32>} : memref<1x8x8xf32, #tpu.memory_space<vmem>>, vector<1x8x8xf32>,
    return
  }
  func.func @transform_0(%arg0: i32) -> (i32, i32, i32) {
    %c0_i32 = arith.constant 0 : i32
    %c0_i32_0 = arith.constant 0 : i32
    %c0_i32_1 = arith.constant 0 : i32
    return %arg0, %c0_i32, %c0_i32_0 : i32, i32, i32
  }
  func.func @transform_1(%arg0: i32) -> (i32, i32) {
    %c0_i32 = arith.constant 0 : i32
    %c0_i32_0 = arith.constant 0 : i32
    %c0_i32_1 = arith.constant 0 : i32
    return %c0_i32, %c0_i32_0 : i32, i32
  }
  func.func @transform_2(%arg0: i32) -> (i32, i32) {
    %c0_i32 = arith.constant 0 : i32
    %c0_i32_0 = arith.constant 0 : i32
    %c0_i32_1 = arith.constant 0 : i32
    return %c0_i32, %c0_i32_0 : i32, i32
  }
  func.func @transform_3(%arg0: i32) -> (i32, i32) {
    %c0_i32 = arith.constant 0 : i32
    %c0_i32_0 = arith.constant 0 : i32
    %c0_i32_1 = arith.constant 0 : i32
    return %c0_i32, %c0_i32_0 : i32, i32
  }
  func.func @transform_4(%arg0: i32) -> (i32, i32) {
    %c0_i32 = arith.constant 0 : i32
    %c0_i32_0 = arith.constant 0 : i32
    %c0_i32_1 = arith.constant 0 : i32
    return %c0_i32, %c0_i32_0 : i32, i32
  }
  func.func @transform_5(%arg0: i32) -> (i32, i32) {
    %c0_i32 = arith.constant 0 : i32
    %c0_i32_0 = arith.constant 0 : i32
    %c0_i32_1 = arith.constant 0 : i32
    return %c0_i32, %c0_i32_0 : i32, i32
  }
  func.func @transform_6(%arg0: i32) -> (i32, i32, i32) {
    %c0_i32 = arith.constant 0 : i32
    %c0_i32_0 = arith.constant 0 : i32
    %c0_i32_1 = arith.constant 0 : i32
    return %arg0, %c0_i32, %c0_i32_0 : i32, i32, i32
  }
}

</mosaic_0001>

<llo_original>
// kernel: tpu_custom_call.1
$region0: #{tpu_custom_call.1}
  #allocation0 [shape = 'u32[]', space=smem, size = 0x4, offset = 0x4, fixed_abs, tag = 'smem constant byte address 0x4 - core index']
  #allocation1 [shape = 'u32[144,128]{1,0:T(1,128)}', space=vmem, size = 0x12000, scoped, tag = 'internal scratch']
  %s0 = inlined_call_operand.vmem [shape: f32[2,8,8], index: 0, kind: input, shape index: {}]
  %s1 = inlined_call_operand.vmem [shape: f32[2,8], index: 1, kind: input, shape index: {}]
  %s2 = inlined_call_operand.vmem [shape: f32[8,4], index: 2, kind: input, shape index: {}]
  %s3 = inlined_call_operand.vmem [shape: f32[8,1], index: 3, kind: input, shape index: {}]
  %s4 = inlined_call_operand.vmem [shape: f32[8,3], index: 4, kind: input, shape index: {}]
  %s5 = inlined_call_operand.vmem [shape: f32[8,1], index: 5, kind: input, shape index: {}]
  %s6 = inlined_call_operand.hbm [shape: f32[2,8,8], index: 6, kind: output, shape index: {}]
  %s7 = sld [smem:[#allocation0]]
  $region57: #{tpu_custom_call.1} parent=0
    _
  %s9 = ssub.s32 1, %s7
  %s10 = scalar_select 0, %s9, %s7
  $region1: #{tpu_custom_call.1} parent=0
    #allocation2 [shape = 'u8[8192]{0}', space=vmem, size = 0x2000, scoped, tag = 'output window, operand 0']
    #allocation3 [shape = 's32[2]{0}', space=sflag, size = 0x8, scoped, tag = 'scoped memory for tpu_custom_call.1']
    %11 = vsyncpa [#allocation3], 0
    %s12 = scalar_lea.sflag [#allocation3], 1
    %13 = vsyncpa %s12, 0
    loop: start=0, step=1, limit=4
    $region2: #{tpu_custom_call.1} parent=1 // loop_pre_header
      _
    $region3: #{tpu_custom_call.1} parent=1 // loop_header
      %s15 = sphi 0, %s19
      %p16 = scmp.ge.s32.totalorder %s15, 4
      %s25 = sphi 0, %s27
      %s28 = sphi 0, %s25
      %s29 = sphi 0, %s28
      %s45 = sphi 0, %s29
      %s49 = sphi 0, %s49
      %s51 = sphi 0, %s49
      %s52 = sphi 0, %s51
      %s66 = sphi 0, %s52
      %s70 = sphi 0, %s70
      %s72 = sphi 0, %s70
      %s73 = sphi 0, %s72
      %s87 = sphi 0, %s73
      %s91 = sphi 0, %s91
      %s93 = sphi 0, %s91
      %s94 = sphi 0, %s93
      %s108 = sphi 0, %s94
      %s112 = sphi 0, %s112
      %s114 = sphi 0, %s112
      %s115 = sphi 0, %s114
      %s129 = sphi 0, %s115
      %s133 = sphi 0, %s133
      %s135 = sphi 0, %s133
      %s136 = sphi 0, %s135
      %s150 = sphi 0, %s136
      %s156 = sphi 0, %s158
      %s159 = sphi 0, %s156
      %s160 = sphi 0, %s159
      %s176 = sphi 0, %s160
    $region4: #{tpu_custom_call.1} parent=1 // loop_header_branch
      %18 = sbr.rel (%p16) target = $region8
    $region5: #{tpu_custom_call.1} parent=1 // loop_body
      %s20 = ssub.s32 %s15, 1
      %s21 = ssub.s32 %s15, 2
      %s22 = sadd.s32 %s15, 1
      %s23 = ssub.s32 %s15, %s22
      %p24 = scmp.eq.s32.totalorder %s23, 0
      %s26 = sadd.s32 %s25, 1
      %s27 = scalar_select %p24, %s25, %s26
      %p30 = pneg %p24
      %p31 = scmp.eq.s32.totalorder %s15, 1
      %p32 = por %p30, %p31
      %p33 = scmp.ne.s32.totalorder %s25, %s28
      %p34 = scmp.eq.s32.totalorder %s15, 0
      %p35 = por %p33, %p34
      %p36 = scmp.ne.s32.totalorder %s25, %s28
      %p37 = scmp.eq.s32.totalorder %s20, 1
      %p38 = por %p36, %p37
      %p39 = scmp.ne.s32.totalorder %s28, %s29
      %p40 = scmp.eq.s32.totalorder %s20, 0
      %p41 = por %p39, %p40
      %p42 = scmp.ne.s32.totalorder %s28, %s29
      %p43 = scmp.eq.s32.totalorder %s21, 1
      %p44 = por %p42, %p43
      %p46 = scmp.ne.s32.totalorder %s29, %s45
      %p47 = scmp.eq.s32.totalorder %s21, 0
      %p48 = por %p46, %p47
      %s50 = sadd.s32 %s49, 1
      %p53 = scmp.eq.s32.totalorder %s15, 1
      %p54 = scmp.ne.s32.totalorder %s49, %s51
      %p55 = scmp.eq.s32.totalorder %s15, 0
      %p56 = por %p54, %p55
      %p57 = scmp.ne.s32.totalorder %s49, %s51
      %p58 = scmp.eq.s32.totalorder %s20, 1
      %p59 = por %p57, %p58
      %p60 = scmp.ne.s32.totalorder %s51, %s52
      %p61 = scmp.eq.s32.totalorder %s20, 0
      %p62 = por %p60, %p61
      %p63 = scmp.ne.s32.totalorder %s51, %s52
      %p64 = scmp.eq.s32.totalorder %s21, 1
      %p65 = por %p63, %p64
      %p67 = scmp.ne.s32.totalorder %s52, %s66
      %p68 = scmp.eq.s32.totalorder %s21, 0
      %p69 = por %p67, %p68
      %s71 = sadd.s32 %s70, 1
      %p74 = scmp.eq.s32.totalorder %s15, 1
      %p75 = scmp.ne.s32.totalorder %s70, %s72
      %p76 = scmp.eq.s32.totalorder %s15, 0
      %p77 = por %p75, %p76
      %p78 = scmp.ne.s32.totalorder %s70, %s72
      %p79 = scmp.eq.s32.totalorder %s20, 1
      %p80 = por %p78, %p79
      %p81 = scmp.ne.s32.totalorder %s72, %s73
      %p82 = scmp.eq.s32.totalorder %s20, 0
      %p83 = por %p81, %p82
      %p84 = scmp.ne.s32.totalorder %s72, %s73
      %p85 = scmp.eq.s32.totalorder %s21, 1
      %p86 = por %p84, %p85
      %p88 = scmp.ne.s32.totalorder %s73, %s87
      %p89 = scmp.eq.s32.totalorder %s21, 0
      %p90 = por %p88, %p89
      %s92 = sadd.s32 %s91, 1
      %p95 = scmp.eq.s32.totalorder %s15, 1
      %p96 = scmp.ne.s32.totalorder %s91, %s93
      %p97 = scmp.eq.s32.totalorder %s15, 0
      %p98 = por %p96, %p97
      %p99 = scmp.ne.s32.totalorder %s91, %s93
      %p100 = scmp.eq.s32.totalorder %s20, 1
      %p101 = por %p99, %p100
      %p102 = scmp.ne.s32.totalorder %s93, %s94
      %p103 = scmp.eq.s32.totalorder %s20, 0
      %p104 = por %p102, %p103
      %p105 = scmp.ne.s32.totalorder %s93, %s94
      %p106 = scmp.eq.s32.totalorder %s21, 1
      %p107 = por %p105, %p106
      %p109 = scmp.ne.s32.totalorder %s94, %s108
      %p110 = scmp.eq.s32.totalorder %s21, 0
      %p111 = por %p109, %p110
      %s113 = sadd.s32 %s112, 1
      %p116 = scmp.eq.s32.totalorder %s15, 1
      %p117 = scmp.ne.s32.totalorder %s112, %s114
      %p118 = scmp.eq.s32.totalorder %s15, 0
      %p119 = por %p117, %p118
      %p120 = scmp.ne.s32.totalorder %s112, %s114
      %p121 = scmp.eq.s32.totalorder %s20, 1
      %p122 = por %p120, %p121
      %p123 = scmp.ne.s32.totalorder %s114, %s115
      %p124 = scmp.eq.s32.totalorder %s20, 0
      %p125 = por %p123, %p124
      %p126 = scmp.ne.s32.totalorder %s114, %s115
      %p127 = scmp.eq.s32.totalorder %s21, 1
      %p128 = por %p126, %p127
      %p130 = scmp.ne.s32.totalorder %s115, %s129
      %p131 = scmp.eq.s32.totalorder %s21, 0
      %p132 = por %p130, %p131
      %s134 = sadd.s32 %s133, 1
      %p137 = scmp.eq.s32.totalorder %s15, 1
      %p138 = scmp.ne.s32.totalorder %s133, %s135
      %p139 = scmp.eq.s32.totalorder %s15, 0
      %p140 = por %p138, %p139
      %p141 = scmp.ne.s32.totalorder %s133, %s135
      %p142 = scmp.eq.s32.totalorder %s20, 1
      %p143 = por %p141, %p142
      %p144 = scmp.ne.s32.totalorder %s135, %s136
      %p145 = scmp.eq.s32.totalorder %s20, 0
      %p146 = por %p144, %p145
      %p147 = scmp.ne.s32.totalorder %s135, %s136
      %p148 = scmp.eq.s32.totalorder %s21, 1
      %p149 = por %p147, %p148
      %p151 = scmp.ne.s32.totalorder %s136, %s150
      %p152 = scmp.eq.s32.totalorder %s21, 0
      %p153 = por %p151, %p152
      %s154 = ssub.s32 %s15, %s22
      %p155 = scmp.eq.s32.totalorder %s154, 0
      %s157 = sadd.s32 %s156, 1
      %s158 = scalar_select %p155, %s156, %s157
      %p161 = pneg %p155
      %p162 = scmp.eq.s32.totalorder %s15, 1
      %p163 = por %p161, %p162
      %p164 = scmp.ne.s32.totalorder %s156, %s159
      %p165 = scmp.eq.s32.totalorder %s15, 0
      %p166 = por %p164, %p165
      %p167 = scmp.ne.s32.totalorder %s156, %s159
      %p168 = scmp.eq.s32.totalorder %s20, 1
      %p169 = por %p167, %p168
      %p170 = scmp.ne.s32.totalorder %s159, %s160
      %p171 = scmp.eq.s32.totalorder %s20, 0
      %p172 = por %p170, %p171
      %p173 = scmp.ne.s32.totalorder %s159, %s160
      %p174 = scmp.eq.s32.totalorder %s21, 1
      %p175 = por %p173, %p174
      %p177 = scmp.ne.s32.totalorder %s160, %s176
      %p178 = scmp.eq.s32.totalorder %s21, 0
      %p179 = por %p177, %p178
      %p180 = scmp.le.s32.totalorder 1, %s15
      %p181 = scmp.lt.s32.totalorder %s15, 3
      %p182 = pnand %p180, %p181
      %p183 = pneg %p182
      // Predicated region
      $region9: #{tpu_custom_call.1} parent=5 // pred_check
        _
      $region10: #{tpu_custom_call.1} parent=5 // pred_check_branch
        %185 = sbr.rel (%p182) target = $region12
      $region11: #{tpu_custom_call.1} parent=5 // pred_region
        %s186 = ssub.s32 %s15, 1
        // Predicated region
        $region13: #{tpu_custom_call.1} parent=11 // pred_check
          %p187 = pneg %p62
        $region14: #{tpu_custom_call.1} parent=11 // pred_check_branch
          %189 = sbr.rel (%p187) target = $region16
        $region15: #{tpu_custom_call.1} parent=11 // pred_region
          _
        $region16: #{tpu_custom_call.1} parent=11 // pred_fallthru
          _
        // Predicated region
        $region17: #{tpu_custom_call.1} parent=11 // pred_check
          %p190 = pneg %p83
        $region18: #{tpu_custom_call.1} parent=11 // pred_check_branch
          %192 = sbr.rel (%p190) target = $region20
        $region19: #{tpu_custom_call.1} parent=11 // pred_region
          _
        $region20: #{tpu_custom_call.1} parent=11 // pred_fallthru
          _
        // Predicated region
        $region21: #{tpu_custom_call.1} parent=11 // pred_check
          %p193 = pneg %p104
        $region22: #{tpu_custom_call.1} parent=11 // pred_check_branch
          %195 = sbr.rel (%p193) target = $region24
        $region23: #{tpu_custom_call.1} parent=11 // pred_region
          _
        $region24: #{tpu_custom_call.1} parent=11 // pred_fallthru
          _
        // Predicated region
        $region25: #{tpu_custom_call.1} parent=11 // pred_check
          %p196 = pneg %p125
        $region26: #{tpu_custom_call.1} parent=11 // pred_check_branch
          %198 = sbr.rel (%p196) target = $region28
        $region27: #{tpu_custom_call.1} parent=11 // pred_region
          _
        $region28: #{tpu_custom_call.1} parent=11 // pred_fallthru
          _
        // Predicated region
        $region29: #{tpu_custom_call.1} parent=11 // pred_check
          %p199 = pneg %p146
        $region30: #{tpu_custom_call.1} parent=11 // pred_check_branch
          %201 = sbr.rel (%p199) target = $region32
        $region31: #{tpu_custom_call.1} parent=11 // pred_region
          _
        $region32: #{tpu_custom_call.1} parent=11 // pred_fallthru
          _
      $region12: #{tpu_custom_call.1} parent=5 // pred_fallthru
        _
      %p202 = scmp.lt.s32.totalorder %s15, 2
      // Predicated region
      $region33: #{tpu_custom_call.1} parent=5 // pred_check
        %p203 = pneg %p202
      $region34: #{tpu_custom_call.1} parent=5 // pred_check_branch
        %205 = sbr.rel (%p203) target = $region36
      $region35: #{tpu_custom_call.1} parent=5 // pred_region
        // Predicated region
        $region37: #{tpu_custom_call.1} parent=35 // pred_check
          %p206 = pneg %p35
        $region38: #{tpu_custom_call.1} parent=35 // pred_check_branch
          %208 = sbr.rel (%p206) target = $region40
        $region39: #{tpu_custom_call.1} parent=35 // pred_region
          %p209 = scmp.lt.s32.totalorder %s15, 1
          %s210 = scalar_select %p209, %s15, 1
          %s211 = smul.addr %s210, 8
          %s212 = scalar_lea.vmem %s0, %s211
        $region40: #{tpu_custom_call.1} parent=35 // pred_fallthru
          _
      $region36: #{tpu_custom_call.1} parent=5 // pred_fallthru
        _
      %p213 = scmp.le.s32.totalorder 1, %s15
      %p214 = scmp.lt.s32.totalorder %s15, 3
      %p215 = pnand %p213, %p214
      %p216 = pneg %p215
      // Predicated region
      $region41: #{tpu_custom_call.1} parent=5 // pred_check
        _
      $region42: #{tpu_custom_call.1} parent=5 // pred_check_branch
        %218 = sbr.rel (%p215) target = $region44
      $region43: #{tpu_custom_call.1} parent=5 // pred_region
        %s219 = ssub.s32 %s15, 1
        %p220 = scmp.lt.s32.totalorder %s20, 1
        %s221 = scalar_select %p220, %s20, 1
        %s222 = smul.addr %s221, 8
        %s223 = scalar_lea.vmem %s0, %s222
        %p224 = pneg %p41
        %p225 = pneg %p38
        %p226 = pneg %p62
        %p227 = pneg %p59
        %p228 = pneg %p83
        %p229 = pneg %p80
        %p230 = pneg %p104
        %p231 = pneg %p101
        %p232 = pneg %p125
        %p233 = pneg %p122
        %p234 = pneg %p146
        %p235 = pneg %p143
        %p236 = pneg %p172
        %p237 = pneg %p169
        %s238 = sand.u32 %s159, 1
        %s239 = scalar_lea.sflag [#allocation3], %s238
        %s240 = sand.u32 %s159, 1
        %s241 = smul.addr %s240, 8
        %s242 = scalar_lea.vmem [#allocation2], %s241
        %p243 = scmp.lt.s32.totalorder %s20, 1
        %s244 = scalar_select %p243, %s20, 1
        %s245 = smul.addr %s244, 8
        %s246 = scalar_lea.vmem %s0, %s245
        %v247 = vld [vmem:[%s246] sm:$0xf]
        %v248 = vld [vmem:[%s246 + $0x4] sm:$0xf]
        %v249 = vld [vmem:[%s2] sm:$0xff]
        %v250 = vld [vmem:[%s3] sm:$0xff]
        %v251 = vld [vmem:[%s4] sm:$0xff]
        %v252 = vld [vmem:[%s5] sm:$0xff]
        %v253 = vld [vmem:[%s1] sm:$0x1]
        %v254 = vld [vmem:[%s1 + $0x1] sm:$0x1]
        %256 = vset.pattern.permute.xlu0 0
        %257 = vperm.xlu0 %256, %v249
        %v258 = vpop.permute.xlu0 %257
        %v260 = vlaneseq
        %v261 = vshrl.u32 %v260, 7
        %v262 = vsub.s32 0, %v261
        %v263 = vrot.slane %v247, %v262
        %v264 = vmul.f32 %v258, %v263
        %265 = vset.pattern.permute.xlu0 1
        %266 = vperm.xlu0 %265, %v249
        %v267 = vpop.permute.xlu0 %266
        %v269 = vlaneseq
        %v270 = vshrl.u32 %v269, 7
        %v271 = vsub.s32 1, %v270
        %v272 = vrot.slane %v247, %v271
        %v273 = vmul.f32 %v267, %v272
        %v274 = vadd.f32 %v264, %v273
        %275 = vset.pattern.permute.xlu0 2
        %276 = vperm.xlu0 %275, %v249
        %v277 = vpop.permute.xlu0 %276
        %v279 = vlaneseq
        %v280 = vshrl.u32 %v279, 7
        %v281 = vsub.s32 2, %v280
        %v282 = vrot.slane %v247, %v281
        %v283 = vmul.f32 %v277, %v282
        %v284 = vadd.f32 %v274, %v283
        %285 = vset.pattern.permute.xlu0 3
        %286 = vperm.xlu0 %285, %v249
        %v287 = vpop.permute.xlu0 %286
        %v289 = vlaneseq
        %v290 = vshrl.u32 %v289, 7
        %v291 = vsub.s32 3, %v290
        %v292 = vrot.slane %v247, %v291
        %v293 = vmul.f32 %v287, %v292
        %v294 = vadd.f32 %v284, %v293
        %296 = vset.pattern.permute.xlu0 0
        %297 = vperm.xlu0 %296, %v250
        %v298 = vpop.permute.xlu0 %297
        %v300 = vadd.f32 %v294, %v298
        %v301 = vmax.f32 %v300, 0.0
        %v302 = vlaneseq
        %v303 = vshrl.u32 %v302, 7
        %v304 = vsub.s32 0, %v303
        %v305 = vrot.slane %v248, %v304
        %v306 = vmul.f32 %v258, %v305
        %v307 = vlaneseq
        %v308 = vshrl.u32 %v307, 7
        %v309 = vsub.s32 1, %v308
        %v310 = vrot.slane %v248, %v309
        %v311 = vmul.f32 %v267, %v310
        %v312 = vadd.f32 %v306, %v311
        %v313 = vlaneseq
        %v314 = vshrl.u32 %v313, 7
        %v315 = vsub.s32 2, %v314
        %v316 = vrot.slane %v248, %v315
        %v317 = vmul.f32 %v277, %v316
        %v318 = vadd.f32 %v312, %v317
        %v319 = vlaneseq
        %v320 = vshrl.u32 %v319, 7
        %v321 = vsub.s32 3, %v320
        %v322 = vrot.slane %v248, %v321
        %v323 = vmul.f32 %v287, %v322
        %v324 = vadd.f32 %v318, %v323
        %v325 = vadd.f32 %v324, %v298
        %v326 = vmax.f32 %v325, 0.0
        %vm327 = vcmask 1047616
        %328 = vrot.lane.b32.xlu0 %v326, 8
        %v329 = vpop.permute.xlu0 %328
        %v330 = vsel %vm327, %v329, %v326
        %331 = vrot.lane.b32.xlu0 %v330, 8
        %v332 = vpop.permute.xlu0 %331
        %v333 = vsel %vm327, %v332, %v326
        %v334 = vlaneseq
        %v335 = vshrl.u32 %v334, 7
        %v336 = vsub.s32 0, %v335
        %v337 = vrot.slane %v253, %v336
        %339 = vrot.lane.b32.xlu0 %v337, 7
        %v340 = vpop.permute.xlu0 %339
        %v342 = vmul.f32 %v333, %v340
        %343 = vrot.lane.b32.xlu0 %v301, 8
        %v344 = vpop.permute.xlu0 %343
        %v345 = vsel %vm327, %v344, %v301
        %346 = vrot.lane.b32.xlu0 %v345, 8
        %v347 = vpop.permute.xlu0 %346
        %v348 = vsel %vm327, %v347, %v301
        %v349 = vlaneseq
        %v350 = vshrl.u32 %v349, 7
        %v351 = vsub.s32 0, %v350
        %v352 = vrot.slane %v254, %v351
        %354 = vrot.lane.b32.xlu0 %v352, 1
        %v355 = vpop.permute.xlu0 %354
        %v357 = vmul.f32 %v348, %v355
        %359 = vset.pattern.permute.xlu0 0
        %360 = vperm.xlu0 %359, %v251
        %v361 = vpop.permute.xlu0 %360
        %v363 = vmul.f32 %v361, %v342
        %364 = vset.pattern.permute.xlu0 1
        %365 = vperm.xlu0 %364, %v251
        %v366 = vpop.permute.xlu0 %365
        %v368 = vmul.f32 %v366, %v301
        %370 = vrot.lane.b32.xlu0 %v368, 7
        %v371 = vpop.permute.xlu0 %370
        %v373 = vadd.f32 %v363, %v371
        %374 = vset.pattern.permute.xlu0 2
        %375 = vperm.xlu0 %374, %v251
        %v376 = vpop.permute.xlu0 %375
        %v378 = vmul.f32 %v376, %v326
        %380 = vrot.lane.b32.xlu0 %v378, 7
        %v381 = vpop.permute.xlu0 %380
        %v383 = vadd.f32 %v373, %v381
        %385 = vset.pattern.permute.xlu0 0
        %386 = vperm.xlu0 %385, %v252
        %v387 = vpop.permute.xlu0 %386
        %v389 = vadd.f32 %v383, %v387
        %v390 = vmax.f32 %v389, 0.0
        %v391 = vmul.f32 %v361, %v301
        %v392 = vmul.f32 %v366, %v326
        %v393 = vadd.f32 %v391, %v392
        %v394 = vmul.f32 %v376, %v357
        %396 = vrot.lane.b32.xlu0 %v394, 127
        %v397 = vpop.permute.xlu0 %396
        %v399 = vadd.f32 %v393, %v397
        %v400 = vadd.f32 %v399, %v387
        %v401 = vmax.f32 %v400, 0.0
        %403 = vrot.lane.b32.xlu0 %v401, 7
        %v404 = vpop.permute.xlu0 %403
        %v406 = vadd.f32 %v390, %v404
        %408 = vrot.lane.b32.xlu0 %v406, 121
        %v409 = vpop.permute.xlu0 %408
        %vm411 = vcmask 64512
        %412 = vst.msk [vmem:[%s242] sm:$0xff] %vm411, %v409
        %s413 = sand.u32 %s159, 1
        %s414 = scalar_lea.sflag [#allocation3], %s413
        %s415 = sand.u32 %s159, 1
        %s416 = smul.addr %s415, 8
        %s417 = scalar_lea.vmem [#allocation2], %s416
        // Predicated region
        $region45: #{tpu_custom_call.1} parent=43 // pred_check
          %p418 = pneg %p169
        $region46: #{tpu_custom_call.1} parent=43 // pred_check_branch
          %420 = sbr.rel (%p418) target = $region48
        $region47: #{tpu_custom_call.1} parent=43 // pred_region
          %s422 = ssub.s32 128, 128
          %423 = vsyncadd %s414, %s422
          %s424 = smul.addr %s20, 128
          %s425 = scalar_lea.hbm %s6, %s424
          %s427 = sshll.u32 %s417, 4
          %s428 = int_to_ptr.vmem [resolvable:$true] %s427
          %430 = dma.vmem_to_hbm [thread:$0]  %s428, 128, %s425, %s414
        $region48: #{tpu_custom_call.1} parent=43 // pred_fallthru
          _
      $region44: #{tpu_custom_call.1} parent=5 // pred_fallthru
        _
      %p431 = scmp.le.s32.totalorder 2, %s15
      // Predicated region
      $region49: #{tpu_custom_call.1} parent=5 // pred_check
        %p432 = pneg %p431
      $region50: #{tpu_custom_call.1} parent=5 // pred_check_branch
        %434 = sbr.rel (%p432) target = $region52
      $region51: #{tpu_custom_call.1} parent=5 // pred_region
        %s435 = ssub.s32 %s15, 2
        // Predicated region
        $region53: #{tpu_custom_call.1} parent=51 // pred_check
          %p436 = pneg %p175
        $region54: #{tpu_custom_call.1} parent=51 // pred_check_branch
          %438 = sbr.rel (%p436) target = $region56
        $region55: #{tpu_custom_call.1} parent=51 // pred_region
          %s439 = sand.u32 %s160, 1
          %s440 = scalar_lea.sflag [#allocation3], %s439
          %s441 = sand.u32 %s160, 1
          %s442 = smul.addr %s441, 8
          %s443 = scalar_lea.vmem [#allocation2], %s442
          %444 = dma.done %s440, 128
        $region56: #{tpu_custom_call.1} parent=51 // pred_fallthru
          _
      $region52: #{tpu_custom_call.1} parent=5 // pred_fallthru
        _
    $region6: #{tpu_custom_call.1} parent=1 // loop_footer
      %s19 = sadd.s32 1, %s15
    $region7: #{tpu_custom_call.1} parent=1 // loop_footer_branch
      %14 = sbr.rel target = $region3
    $region8: #{tpu_custom_call.1} parent=1 // loop_exit
      _
    %445 = vsyncpa [#allocation3], 1
    %s446 = scalar_lea.sflag [#allocation3], 1
    %447 = vsyncpa %s446, 1

</llo_original>
